<compile_context>
chip_gen: v5e
topology: v5e:2x2
jax: 0.10.0
libtpu: 0.0.40
codegen_flags: <defaults>
</compile_context>

<pallas_src>
import jax
import jax.numpy as jnp
from jax.experimental import pallas as pl
from jax.experimental.pallas import tpu as pltpu

LANE = 128  # TPU lane width; the hidden dim is padded to a multiple of this.


# --------------------------------------------------------------------------
# Kernel: two matmuls (normalization and the 2nd/3rd Linear are pre-folded)
# --------------------------------------------------------------------------
def qnet_twin_fwd_kernel(x_ref, w1_ref, b1_ref, w23_ref, b23_ref, q_ref):
    x = x_ref[...]
    h = jnp.dot(x, w1_ref[...], preferred_element_type=jnp.float32) + b1_ref[...]
    h = jnp.maximum(h, 0.0)
    q_ref[...] = (jnp.dot(h, w23_ref[...], preferred_element_type=jnp.float32)
                  + b23_ref[...])


# --------------------------------------------------------------------------
# Parameter prep (one-time, not per forward call)
# --------------------------------------------------------------------------
def _round_up(x, m):
    return ((x + m - 1) // m) * m


def prepare_params(params, lane=LANE):
    """Fold normalization into Linear-1, fold Linear-2 @ Linear-3, lane-pad h."""
    state_avg, state_std, w1, b1, w2, b2, w3, b3 = params
    std = jnp.maximum(state_std, 1e-6)            # guard against tiny std

    # (x - avg)/std @ W1 + b1  ==  x @ (W1/std[:,None]) + (b1 - (avg/std) @ W1)
    w1f = w1 / std[:, None]
    b1f = b1 - (state_avg / std) @ w1

    # (h @ W2 + b2) @ W3 + b3  ==  h @ (W2 @ W3) + (b2 @ W3 + b3)
    w23 = w2 @ w3                                  # [h0, action_dim]
    b23 = b2 @ w3 + b3                             # [action_dim]

    h0 = w1.shape[1]
    action_dim = w3.shape[1]
    h_pad = max(lane, _round_up(h0, lane))         # lane-dense hidden width

    w1p = jnp.pad(w1f, ((0, 0), (0, h_pad - h0)))                 # [S, Hp]
    b1p = jnp.pad(b1f, (0, h_pad - h0)).reshape(1, h_pad)         # [1, Hp]
    w23p = jnp.pad(w23, ((0, h_pad - h0), (0, 0)))                # [Hp, A]
    b23p = b23.reshape(1, action_dim)                             # [1, A]
    return (w1p, b1p, w23p, b23p, action_dim)


def _pick_batch_tile(batch, max_tb=1024):
    """Row tile: multiple of 8, >=2 grid steps when possible, capped at max_tb."""
    if batch <= 8:
        return batch                      # single block; full-dim block is legal
    tb = _round_up(pl.cdiv(batch, 2), 8)  # aim for >= 2 steps (dual-TC on v7x)
    return max(8, min(max_tb, tb))


# --------------------------------------------------------------------------
# Wrapper
# --------------------------------------------------------------------------
def qnet_twin_forward(state, prepared, *, max_batch_tile=1024):
    """state: [B, state_dim] float32 -> q_val: [B, action_dim] float32."""
    w1p, b1p, w23p, b23p, action_dim = prepared
    B, S = state.shape
    H = w1p.shape[1]
    A = w23p.shape[1]                     # == action_dim (no output padding)

    tb = _pick_batch_tile(B, max_batch_tile)
    grid = (pl.cdiv(B, tb),)              # partial last tile is masked by Pallas

    weights = (w1p, b1p, w23p, b23p)
    # Constant index_map -> weights/biases stay VMEM-resident across grid steps.
    resident = lambda a: pl.BlockSpec(a.shape, lambda i: (0, 0))

    cost = pl.CostEstimate(
        flops=2 * B * (S * H + H * A),
        transcendentals=0,
        bytes_accessed=4 * (B * S + B * A + sum(a.size for a in weights)),
    )

    return pl.pallas_call(
        qnet_twin_fwd_kernel,
        out_shape=jax.ShapeDtypeStruct((B, A), jnp.float32),
        grid=grid,
        in_specs=[pl.BlockSpec((tb, S), lambda i: (i, 0))]
                 + [resident(a) for a in weights],
        out_specs=pl.BlockSpec((tb, A), lambda i: (i, 0)),
        compiler_params=pltpu.CompilerParams(
            dimension_semantics=("parallel",)),
        cost_estimate=cost,
    )(state, *weights)


# --------------------------------------------------------------------------
# Synthetic init mirroring the PyTorch __init__ (weights stored [in, out])
# --------------------------------------------------------------------------
def init_params(key, state_dim, dims, action_dim):
    k1, k2, k3, k4, k5 = jax.random.split(key, 5)
    h0, h1 = dims

    def linear_init(k, fan_in, fan_out):
        bound = 1.0 / jnp.sqrt(fan_in)
        kw, kb = jax.random.split(k)
        w = jax.random.uniform(kw, (fan_in, fan_out), jnp.float32, -bound, bound)
        b = jax.random.uniform(kb, (fan_out,), jnp.float32, -bound, bound)
        return w, b

    w1, b1 = linear_init(k1, state_dim, h0)
    w2, b2 = linear_init(k2, h0, h1)

    # orthogonal-style init (std=0.1) for net_val1 weight, bias const 1e-6
    a = jax.random.normal(k3, (h1, action_dim), jnp.float32)
    q, _ = jnp.linalg.qr(a)
    w3 = 0.1 * q[:, :action_dim]
    b3 = jnp.full((action_dim,), 1e-6, jnp.float32)

    # Non-trivial running stats so the normalization fold is actually exercised.
    state_avg = 0.3 * jax.random.normal(k4, (state_dim,), jnp.float32)
    state_std = jax.random.uniform(k5, (state_dim,), jnp.float32, 0.5, 1.5)
    return (state_avg, state_std, w1, b1, w2, b2, w3, b3)


def reference_forward(state, params):
    state_avg, state_std, w1, b1, w2, b2, w3, b3 = params
    x = (state - state_avg) / state_std
    h = jnp.maximum(x @ w1 + b1, 0.0)
    s_enc = h @ w2 + b2
    return s_enc @ w3 + b3


if __name__ == "__main__":
    key = jax.random.PRNGKey(0)
    kx, kp = jax.random.split(key)

    batch = 8
    state_dim = 16
    dims = [32, 32]
    action_dim = 4

    params = init_params(kp, state_dim, dims, action_dim)
    prepared = prepare_params(params)

    # Case 1: small batch, single block.
    state = jax.random.normal(kx, (batch, state_dim), jnp.float32)
    q = jax.block_until_ready(qnet_twin_forward(state, prepared))
    q_ref = reference_forward(state, params)
    assert q.shape == (batch, action_dim)
    assert jnp.allclose(q, q_ref, atol=5e-5, rtol=1e-4), "mismatch vs reference"

    # Case 2: tiled grid with a masked partial last tile (B=24 -> tb=16, 2 steps).
    state2 = jax.random.normal(jax.random.PRNGKey(1), (24, state_dim), jnp.float32)
    q2 = jax.block_until_ready(qnet_twin_forward(state2, prepared))
    q2_ref = reference_forward(state2, params)
    assert q2.shape == (24, action_dim)
    assert jnp.allclose(q2, q2_ref, atol=5e-5, rtol=1e-4), "mismatch (grid case)"

    # Case 3: ragged batch not a multiple of 8 (B=13 -> tb=8, 2 steps, masked).
    state3 = jax.random.normal(jax.random.PRNGKey(2), (13, state_dim), jnp.float32)
    q3 = jax.block_until_ready(qnet_twin_forward(state3, prepared))
    q3_ref = reference_forward(state3, params)
    assert q3.shape == (13, action_dim)
    assert jnp.allclose(q3, q3_ref, atol=5e-5, rtol=1e-4), "mismatch (ragged case)"

    print("KERNEL_OK")
</pallas_src>

<mosaic_0001>
module attributes {stable_mosaic.version = 11 : i64} {
  func.func @qnet_twin_fwd_kernel(%arg0: i32, %arg1: memref<8x16xf32, #tpu.memory_space<vmem>>, %arg2: memref<16x128xf32, #tpu.memory_space<vmem>>, %arg3: memref<1x128xf32, #tpu.memory_space<vmem>>, %arg4: memref<128x4xf32, #tpu.memory_space<vmem>>, %arg5: memref<1x4xf32, #tpu.memory_space<vmem>>, %arg6: memref<8x4xf32, #tpu.memory_space<vmem>>) attributes {dimension_semantics = [#tpu.dimension_semantics<parallel>], iteration_bounds = array<i64: 1>, scalar_prefetch = 0 : i64, scratch_operands = 0 : i64, tpu.core_type = #tpu.core_type<tc>, window_params = [{transform_indices = @transform_0, window_bounds = array<i64: 8, 16>}, {pipeline_mode = #tpu.pipeline_mode<synchronous>, transform_indices = @transform_1, window_bounds = array<i64: 16, 128>}, {pipeline_mode = #tpu.pipeline_mode<synchronous>, transform_indices = @transform_2, window_bounds = array<i64: 1, 128>}, {pipeline_mode = #tpu.pipeline_mode<synchronous>, transform_indices = @transform_3, window_bounds = array<i64: 128, 4>}, {pipeline_mode = #tpu.pipeline_mode<synchronous>, transform_indices = @transform_4, window_bounds = array<i64: 1, 4>}, {transform_indices = @transform_5, window_bounds = array<i64: 8, 4>}]} {
    %c0 = arith.constant 0 : index
    %c0_0 = arith.constant 0 : index
    %0 = vector.load %arg1[%c0, %c0_0] : memref<8x16xf32, #tpu.memory_space<vmem>>, vector<8x16xf32>
    %c0_1 = arith.constant 0 : index
    %c0_2 = arith.constant 0 : index
    %1 = vector.load %arg2[%c0_1, %c0_2] : memref<16x128xf32, #tpu.memory_space<vmem>>, vector<16x128xf32>
    %cst = arith.constant dense<0.000000e+00> : vector<8x128xf32>
    %2 = tpu.matmul %0, %1, %cst {dimension_numbers = #tpu.dot_dimension_numbers<[1], [0], [0], [1], [0, 0, 1, 1], [], []>} : vector<8x16xf32>, vector<16x128xf32>, vector<8x128xf32> -> vector<8x128xf32>
    %c0_3 = arith.constant 0 : index
    %c0_4 = arith.constant 0 : index
    %3 = vector.load %arg3[%c0_3, %c0_4] : memref<1x128xf32, #tpu.memory_space<vmem>>, vector<1x128xf32>
    %4 = vector.broadcast %3 : vector<1x128xf32> to vector<8x128xf32>
    %5 = arith.addf %2, %4 : vector<8x128xf32>
    %cst_5 = arith.constant 0.000000e+00 : f32
    %6 = vector.broadcast %cst_5 : f32 to vector<8x128xf32>
    %7 = arith.maximumf %5, %6 : vector<8x128xf32>
    %c0_6 = arith.constant 0 : index
    %c0_7 = arith.constant 0 : index
    %8 = vector.load %arg4[%c0_6, %c0_7] : memref<128x4xf32, #tpu.memory_space<vmem>>, vector<128x4xf32>
    %cst_8 = arith.constant dense<0.000000e+00> : vector<8x4xf32>
    %9 = tpu.matmul %7, %8, %cst_8 {dimension_numbers = #tpu.dot_dimension_numbers<[1], [0], [0], [1], [0, 0, 1, 1], [], []>} : vector<8x128xf32>, vector<128x4xf32>, vector<8x4xf32> -> vector<8x4xf32>
    %c0_9 = arith.constant 0 : index
    %c0_10 = arith.constant 0 : index
    %10 = vector.load %arg5[%c0_9, %c0_10] : memref<1x4xf32, #tpu.memory_space<vmem>>, vector<1x4xf32>
    %11 = vector.broadcast %10 : vector<1x4xf32> to vector<8x4xf32>
    %12 = arith.addf %9, %11 : vector<8x4xf32>
    %c0_11 = arith.constant 0 : index
    %c0_12 = arith.constant 0 : index
    %13 = vector.load %arg6[%c0_11, %c0_12] : memref<8x4xf32, #tpu.memory_space<vmem>>, vector<8x4xf32>
    tpu.vector_store %arg6[%c0_11, %c0_12], %12 {strides = array<i32>} : memref<8x4xf32, #tpu.memory_space<vmem>>, vector<8x4xf32>,
    return
  }
  func.func @transform_0(%arg0: i32) -> (i32, i32) {
    %c0_i32 = arith.constant 0 : i32
    %c0_i32_0 = arith.constant 0 : i32
    return %arg0, %c0_i32 : i32, i32
  }
  func.func @transform_1(%arg0: i32) -> (i32, i32) {
    %c0_i32 = arith.constant 0 : i32
    %c0_i32_0 = arith.constant 0 : i32
    %c0_i32_1 = arith.constant 0 : i32
    return %c0_i32, %c0_i32_0 : i32, i32
  }
  func.func @transform_2(%arg0: i32) -> (i32, i32) {
    %c0_i32 = arith.constant 0 : i32
    %c0_i32_0 = arith.constant 0 : i32
    %c0_i32_1 = arith.constant 0 : i32
    return %c0_i32, %c0_i32_0 : i32, i32
  }
  func.func @transform_3(%arg0: i32) -> (i32, i32) {
    %c0_i32 = arith.constant 0 : i32
    %c0_i32_0 = arith.constant 0 : i32
    %c0_i32_1 = arith.constant 0 : i32
    return %c0_i32, %c0_i32_0 : i32, i32
  }
  func.func @transform_4(%arg0: i32) -> (i32, i32) {
    %c0_i32 = arith.constant 0 : i32
    %c0_i32_0 = arith.constant 0 : i32
    %c0_i32_1 = arith.constant 0 : i32
    return %c0_i32, %c0_i32_0 : i32, i32
  }
  func.func @transform_5(%arg0: i32) -> (i32, i32) {
    %c0_i32 = arith.constant 0 : i32
    %c0_i32_0 = arith.constant 0 : i32
    return %arg0, %c0_i32 : i32, i32
  }
}

</mosaic_0001>

<llo_original>
// kernel: tpu_custom_call.1
$region0: #{tpu_custom_call.1}
  #allocation0 [shape = 'u32[]', space=smem, size = 0x4, offset = 0x4, fixed_abs, tag = 'smem constant byte address 0x4 - core index']
  #allocation1 [shape = 'u32[72,128]{1,0:T(1,128)}', space=vmem, size = 0x9000, scoped, tag = 'internal scratch']
  %s0 = inlined_call_operand.vmem [shape: f32[8,16], index: 0, kind: input, shape index: {}]
  %s1 = inlined_call_operand.vmem [shape: f32[16,128], index: 1, kind: input, shape index: {}]
  %s2 = inlined_call_operand.vmem [shape: f32[1,128], index: 2, kind: input, shape index: {}]
  %s3 = inlined_call_operand.vmem [shape: f32[128,4], index: 3, kind: input, shape index: {}]
  %s4 = inlined_call_operand.vmem [shape: f32[1,4], index: 4, kind: input, shape index: {}]
  %s5 = inlined_call_operand.vmem [shape: f32[8,4], index: 5, kind: output, shape index: {}]
  %s6 = sld [smem:[#allocation0]]
  $region30: #{tpu_custom_call.1} parent=0
    _
  %s8 = ssub.s32 1, %s6
  %s9 = scalar_select 0, %s8, %s6
  // Predicated region
  $region2: #{tpu_custom_call.1} parent=0 // pred_check
    _
  $region3: #{tpu_custom_call.1} parent=0 // pred_check_branch
    %11 = sbr.rel (0) target = $region5
  $region4: #{tpu_custom_call.1} parent=0 // pred_region
    _
  $region5: #{tpu_custom_call.1} parent=0 // pred_fallthru
    _
  // Predicated region
  $region6: #{tpu_custom_call.1} parent=0 // pred_check
    _
  $region7: #{tpu_custom_call.1} parent=0 // pred_check_branch
    %13 = sbr.rel (0) target = $region9
  $region8: #{tpu_custom_call.1} parent=0 // pred_region
    _
  $region9: #{tpu_custom_call.1} parent=0 // pred_fallthru
    _
  // Predicated region
  $region10: #{tpu_custom_call.1} parent=0 // pred_check
    _
  $region11: #{tpu_custom_call.1} parent=0 // pred_check_branch
    %15 = sbr.rel (0) target = $region13
  $region12: #{tpu_custom_call.1} parent=0 // pred_region
    _
  $region13: #{tpu_custom_call.1} parent=0 // pred_fallthru
    _
  // Predicated region
  $region14: #{tpu_custom_call.1} parent=0 // pred_check
    _
  $region15: #{tpu_custom_call.1} parent=0 // pred_check_branch
    %17 = sbr.rel (0) target = $region17
  $region16: #{tpu_custom_call.1} parent=0 // pred_region
    _
  $region17: #{tpu_custom_call.1} parent=0 // pred_fallthru
    _
  // Predicated region
  $region18: #{tpu_custom_call.1} parent=0 // pred_check
    _
  $region19: #{tpu_custom_call.1} parent=0 // pred_check_branch
    %19 = sbr.rel (0) target = $region21
  $region20: #{tpu_custom_call.1} parent=0 // pred_region
    _
  $region21: #{tpu_custom_call.1} parent=0 // pred_fallthru
    _
  %v20 = vld [vmem:[%s0] sm:$0xff]
  %v21 = vld [vmem:[%s1] sm:$0xff]
  %v22 = vld [vmem:[%s1 + $0x8] sm:$0xff]
  %v23 = vld [vmem:[%s2] sm:$0x1]
  %v25 = vperm.slane %v23, 0
  %vm27 = vcmask 130048
  %v29 = vsel %vm27, %v20, 0
  %31 = vmatpush.msra.mxu0 0.0
  %32 = vmatpush.msra.mxu0 0.0
  %33 = vmatpush.msra.mxu0 0.0
  %34 = vmatpush.msra.mxu0 0.0
  %35 = vmatpush.msra.mxu0 0.0
  %36 = vmatpush.msra.mxu0 0.0
  %37 = vmatpush.msra.mxu0 0.0
  %38 = vmatpush.msra.mxu0 0.0
  %39 = vmatpush.msra.mxu0 0.0
  %40 = vmatpush.msra.mxu0 0.0
  %41 = vmatpush.msra.mxu0 0.0
  %42 = vmatpush.msra.mxu0 0.0
  %43 = vmatpush.msra.mxu0 0.0
  %44 = vmatpush.msra.mxu0 0.0
  %45 = vmatpush.msra.mxu0 %v22
  %46 = vmatpush.msra.mxu0 %v21
  %47 = vmatmul.f32.gmra.mxu0 %v29
  %v48 = vpop.f32.mrf.mxu0
  %v49 = vadd.f32 %v25, %v48
  %50 = vdwg.mxu0
  %v51 = vmax.f32 %v49, 0.0
  %v52 = vld [vmem:[%s3] sm:$0xff]
  %v53 = vld [vmem:[%s3 + $0x8] sm:$0xff]
  %v54 = vld [vmem:[%s3 + $0x10] sm:$0xff]
  %v55 = vld [vmem:[%s3 + $0x18] sm:$0xff]
  %v56 = vld [vmem:[%s3 + $0x20] sm:$0xff]
  %v57 = vld [vmem:[%s3 + $0x28] sm:$0xff]
  %v58 = vld [vmem:[%s3 + $0x30] sm:$0xff]
  %v59 = vld [vmem:[%s3 + $0x38] sm:$0xff]
  %v60 = vld [vmem:[%s3 + $0x40] sm:$0xff]
  %v61 = vld [vmem:[%s3 + $0x48] sm:$0xff]
  %v62 = vld [vmem:[%s3 + $0x50] sm:$0xff]
  %v63 = vld [vmem:[%s3 + $0x58] sm:$0xff]
  %v64 = vld [vmem:[%s3 + $0x60] sm:$0xff]
  %v65 = vld [vmem:[%s3 + $0x68] sm:$0xff]
  %v66 = vld [vmem:[%s3 + $0x70] sm:$0xff]
  %v67 = vld [vmem:[%s3 + $0x78] sm:$0xff]
  %v68 = vld [vmem:[%s4] sm:$0x1]
  %v70 = vperm.slane %v68, 0
  %72 = vmatpush.msra.mxu0 %v67
  %73 = vmatpush.msra.mxu0 %v66
  %74 = vmatpush.msra.mxu0 %v65
  %75 = vmatpush.msra.mxu0 %v64
  %76 = vmatpush.msra.mxu0 %v63
  %77 = vmatpush.msra.mxu0 %v62
  %78 = vmatpush.msra.mxu0 %v61
  %79 = vmatpush.msra.mxu0 %v60
  %80 = vmatpush.msra.mxu0 %v59
  %81 = vmatpush.msra.mxu0 %v58
  %82 = vmatpush.msra.mxu0 %v57
  %83 = vmatpush.msra.mxu0 %v56
  %84 = vmatpush.msra.mxu0 %v55
  %85 = vmatpush.msra.mxu0 %v54
  %86 = vmatpush.msra.mxu0 %v53
  %87 = vmatpush.msra.mxu0 %v52
  %88 = vmatmul.f32.gmra.mxu0 %v51
  %v89 = vpop.f32.mrf.mxu0
  %v90 = vadd.f32 %v70, %v89
  %91 = vdwg.mxu0
  %vm92 = vcmask 31744
  %93 = vst.msk [vmem:[%s5] sm:$0xff] %vm92, %v90
  // Predicated region
  $region22: #{tpu_custom_call.1} parent=0 // pred_check
    _
  $region23: #{tpu_custom_call.1} parent=0 // pred_check_branch
    %95 = sbr.rel (0) target = $region25
  $region24: #{tpu_custom_call.1} parent=0 // pred_region
    _
  $region25: #{tpu_custom_call.1} parent=0 // pred_fallthru
    _
  // Predicated region
  $region26: #{tpu_custom_call.1} parent=0 // pred_check
    _
  $region27: #{tpu_custom_call.1} parent=0 // pred_check_branch
    %97 = sbr.rel (0) target = $region29
  $region28: #{tpu_custom_call.1} parent=0 // pred_region
    _
  $region29: #{tpu_custom_call.1} parent=0 // pred_fallthru
    _

</llo_original>
